<compile_context>
chip_gen: v7x
topology: tpu7x:2x2x1
jax: 0.10.0
libtpu: 0.0.40
codegen_flags: <defaults>
</compile_context>

<pallas_src>
import functools

import jax
import jax.numpy as jnp
from jax.experimental import pallas as pl
from jax.experimental.pallas import tpu as pltpu


# ----------------------------------------------------------------------------
# Helpers
# ----------------------------------------------------------------------------
def _vmem_budget_bytes():
    """Per-generation VMEM budget (v7x: 64 MiB physical, v5e/v6e: 128 MiB)."""
    cap = None
    try:
        info = pltpu.get_tpu_info()
        cap = getattr(info, "vmem_capacity_bytes", None)
    except Exception:
        cap = None
    if not cap:
        cap = 64 << 20            # conservative default == v7x physical VMEM
    return int(cap) * 3 // 4      # headroom for compiler scratch / semaphores


def _row_to_col(row):
    """(1, N) -> (N, 1) using only broadcast / compare / select / lane-reduce."""
    n = row.shape[-1]
    r = jax.lax.broadcasted_iota(jnp.int32, (n, n), 0)
    c = jax.lax.broadcasted_iota(jnp.int32, (n, n), 1)
    sel = jnp.where(r == c, jnp.broadcast_to(row, (n, n)), 0.0)
    return jnp.sum(sel, axis=1, keepdims=True)


def _se_scale(mean_col, w1_ref, bns_ref, bnb_ref, wat_ref, wb_ref):
    """Squeeze/excite chain on the per-batch channel mean -> (C_out, 1) scale = att + 1.

    Tiny per-batch math: broadcast-multiply + sublane/lane reductions only (the MXU
    stays free for whatever surrounds this block).
    """
    # pooled = mean_HW(BN(conv1x1(x))) = mean_HW(x) @ w1 * s + b   (linearity fold)
    pooled = jnp.sum(w1_ref[...] * mean_col, axis=0, keepdims=True)        # (1, C_out)
    pooled = pooled * bns_ref[...] + bnb_ref[...]                          # (1, C_out)
    h = jnp.maximum(jnp.sum(wat_ref[...] * pooled, axis=1, keepdims=True), 0.0)  # (C_mid, 1)
    att = jax.nn.sigmoid(jnp.sum(wb_ref[...] * h, axis=0, keepdims=True))  # (1, C_out)
    # Fold the residual add:  fcat * att + fcat == fcat * (att + 1).
    return _row_to_col(att + 1.0)                                          # (C_out, 1)


# ----------------------------------------------------------------------------
# Fused single pass: read x once, write out once (per-batch resident block)
# ----------------------------------------------------------------------------
def _fused_kernel(x_ref, w1_ref, bns_ref, bnb_ref, wat_ref, wb_ref, o_ref, *, inv_hw):
    x = x_ref[...]                                                         # (C, HW)
    mean_col = jnp.sum(x.astype(jnp.float32), axis=1, keepdims=True) * inv_hw
    scale = _se_scale(mean_col, w1_ref, bns_ref, bnb_ref, wat_ref, wb_ref)  # (C, 1) f32
    o_ref[...] = (x * scale).astype(o_ref.dtype)


# ----------------------------------------------------------------------------
# Fallback pass 1: spatial-sum reduction (VPU-only inner loop) + SE finalize
# ----------------------------------------------------------------------------
def _reduce_se_kernel(x_ref, w1_ref, bns_ref, bnb_ref, wat_ref, wb_ref,
                      scale_ref, acc_ref, *, inv_hw):
    t = pl.program_id(1)

    @pl.when(t == 0)
    def _():
        acc_ref[...] = jnp.zeros_like(acc_ref)

    # Lane-wide elementwise accumulation: one vadd per vreg per tile; the single
    # cross-lane reduction happens once per batch in the finalize below.
    acc_ref[...] += x_ref[...].astype(jnp.float32)

    @pl.when(t == pl.num_programs(1) - 1)
    def _():
        mean_col = jnp.sum(acc_ref[...], axis=1, keepdims=True) * inv_hw   # (C_in, 1)
        scale_ref[...] = _se_scale(mean_col, w1_ref, bns_ref, bnb_ref, wat_ref, wb_ref)


# ----------------------------------------------------------------------------
# Fallback pass 2: tiled elementwise  out = x * (att + 1)
# ----------------------------------------------------------------------------
def _scale_kernel(x_ref, s_ref, o_ref):
    # x_ref: (C, T) native dtype; s_ref: (C, 1) f32 broadcast along lanes.
    o_ref[...] = (x_ref[...] * s_ref[...]).astype(o_ref.dtype)


def _pick_tile(hw_padded, per_column_bytes, reserved_bytes, budget, requested=None):
    """Largest T (multiple of 128 dividing hw_padded) whose working set fits budget."""
    assert hw_padded % 128 == 0
    g = hw_padded // 128
    if requested is not None and requested % 128 == 0 and hw_padded % requested == 0:
        return int(requested)
    best = 128
    for d in range(1, g + 1):
        if g % d:
            continue
        t = 128 * d
        if t * per_column_bytes + reserved_bytes <= budget:
            best = t
    return best


# ----------------------------------------------------------------------------
# Wrapper
# ----------------------------------------------------------------------------
def mhil_block(fcat_nchw, w1, bn_scale, bn_bias, wa, wb, *,
               spatial_tile=None, force_two_pass=False, vmem_budget_bytes=None):
    """fcat_nchw: (B, C, H, W); returns (B, C, H, W) with the same dtype."""
    B, C, H, W = fcat_nchw.shape
    HW = H * W
    C_in, C_out = w1.shape
    C_mid = wa.shape[1]
    assert C == C_in
    assert C == C_out, "MHILBlock broadcast fcat*atten requires in_chan == out_chan"

    dtype = fcat_nchw.dtype
    isz = dtype.itemsize
    budget = int(vmem_budget_bytes) if vmem_budget_bytes else _vmem_budget_bytes()

    # NCHW viewed as (B, C, HW): pure reshape, no transpose, no dtype copy.
    x = fcat_nchw.reshape(B, C, HW)

    # Tiny constant operands; the SE math runs in f32 regardless of tensor dtype.
    w1f = w1.astype(jnp.float32)                                # (C_in, C_out)
    wat = jnp.transpose(wa).astype(jnp.float32)                 # (C_mid, C_out)
    wbf = wb.astype(jnp.float32)                                # (C_mid, C_out)
    bns = bn_scale.reshape(1, C_out).astype(jnp.float32)
    bnb = bn_bias.reshape(1, C_out).astype(jnp.float32)
    weight_bytes = 4 * (C_in * C_out + 2 * C_mid * C_out + 2 * C_out)

    inv_hw = 1.0 / HW
    se_flops = 3 * C_in * C_out + 4 * C_mid * C_out + 6 * C_out

    # --------------- fused single pass (default when it fits VMEM) ----------------
    # Conservative live VMEM: double-buffered in + out blocks + f32 temporaries + weights.
    fused_live = C * HW * (2 * isz + 2 * isz + 8) + 2 * weight_bytes + (1 << 20)
    if (not force_two_pass) and fused_live <= budget:
        cost = pl.CostEstimate(
            flops=int(2 * B * HW * C + B * se_flops),
            transcendentals=int(B * C_out),
            bytes_accessed=int(2 * B * HW * C * isz + weight_bytes),
        )
        out = pl.pallas_call(
            functools.partial(_fused_kernel, inv_hw=inv_hw),
            out_shape=jax.ShapeDtypeStruct((B, C, HW), dtype),
            grid=(B,),
            in_specs=[
                pl.BlockSpec((None, C, HW), lambda b: (b, 0, 0)),     # x (one batch)
                pl.BlockSpec((C_in, C_out), lambda b: (0, 0)),        # w1
                pl.BlockSpec((1, C_out), lambda b: (0, 0)),           # folded BN scale
                pl.BlockSpec((1, C_out), lambda b: (0, 0)),           # folded BN bias
                pl.BlockSpec((C_mid, C_out), lambda b: (0, 0)),       # wa^T
                pl.BlockSpec((C_mid, C_out), lambda b: (0, 0)),       # wb
            ],
            out_specs=pl.BlockSpec((None, C, HW), lambda b: (b, 0, 0)),
            compiler_params=pltpu.CompilerParams(
                dimension_semantics=("parallel",),
                vmem_limit_bytes=budget),
            cost_estimate=cost,
        )(x, w1f, bns, bnb, wat, wbf)
        return out.reshape(B, C, H, W)

    # --------------------- two-pass tiled fallback (large C*HW) -------------------
    # Tiles must be lane-dense (multiples of 128); pad HW only when it is not a
    # 128-multiple.  TODO(synk): the pad/slice costs one extra HBM round trip of x;
    # a masked-tail grid would avoid it but is not implemented.
    hwp = ((HW + 127) // 128) * 128
    if hwp != HW:
        x = jnp.pad(x, ((0, 0), (0, 0), (0, hwp - HW)))

    per_col = C * (4 * isz + 8)            # in+out double-buffered + f32 acc/temps per lane
    reserved = 2 * weight_bytes + (2 << 20)
    T = _pick_tile(hwp, per_col, reserved, budget, requested=spatial_tile)
    n_tiles = hwp // T

    # ---- pass 1: per-(b, c) attention scale (att + 1), written as a column ----
    red_cost = pl.CostEstimate(
        flops=int(B * hwp * C + B * se_flops),
        transcendentals=int(B * C_out),
        bytes_accessed=int(B * hwp * C * isz + B * C_out * 4 + weight_bytes),
    )
    scale_col = pl.pallas_call(
        functools.partial(_reduce_se_kernel, inv_hw=inv_hw),
        out_shape=jax.ShapeDtypeStruct((B, C_out, 1), jnp.float32),
        grid=(B, n_tiles),
        in_specs=[
            pl.BlockSpec((None, C, T), lambda b, t: (b, 0, t)),       # x tile
            pl.BlockSpec((C_in, C_out), lambda b, t: (0, 0)),         # w1
            pl.BlockSpec((1, C_out), lambda b, t: (0, 0)),            # folded BN scale
            pl.BlockSpec((1, C_out), lambda b, t: (0, 0)),            # folded BN bias
            pl.BlockSpec((C_mid, C_out), lambda b, t: (0, 0)),        # wa^T
            pl.BlockSpec((C_mid, C_out), lambda b, t: (0, 0)),        # wb
        ],
        out_specs=pl.BlockSpec((None, C_out, 1), lambda b, t: (b, 0, 0)),
        scratch_shapes=[pltpu.VMEM((C_in, T), jnp.float32)],
        compiler_params=pltpu.CompilerParams(
            dimension_semantics=("parallel", "arbitrary"),
            vmem_limit_bytes=budget),
        cost_estimate=red_cost,
    )(x, w1f, bns, bnb, wat, wbf)

    # ---- pass 2: tiled elementwise out = x * (att + 1) ----
    ew_cost = pl.CostEstimate(
        flops=int(B * hwp * C),
        transcendentals=0,
        bytes_accessed=int(2 * B * hwp * C * isz + B * C * 4),
    )
    out = pl.pallas_call(
        _scale_kernel,
        out_shape=jax.ShapeDtypeStruct((B, C, hwp), dtype),
        grid=(B, n_tiles),
        in_specs=[
            pl.BlockSpec((None, C, T), lambda b, t: (b, 0, t)),       # x tile
            pl.BlockSpec((None, C, 1), lambda b, t: (b, 0, 0)),       # per-channel scale
        ],
        out_specs=pl.BlockSpec((None, C, T), lambda b, t: (b, 0, t)),
        compiler_params=pltpu.CompilerParams(
            dimension_semantics=("parallel", "parallel"),
            vmem_limit_bytes=budget),
        cost_estimate=ew_cost,
    )(x, scale_col)

    if hwp != HW:
        out = out[:, :, :HW]
    return out.reshape(B, C, H, W)


# ----------------------------------------------------------------------------
# Parameter init (kaiming_normal_(a=1) conv weights; eval-mode folded BatchNorm)
# ----------------------------------------------------------------------------
def init_params(key, in_chan, out_chan):
    k1, k2, k3, k4, k5, k6, k7 = jax.random.split(key, 7)
    mid = out_chan // 4
    # kaiming_normal_ with a=1: gain = sqrt(2/(1+1)) = 1, std = 1/sqrt(fan_in).
    # Stored as (in, out) so references do x @ w.
    w1 = jax.random.normal(k1, (in_chan, out_chan), jnp.float32) * (1.0 / jnp.sqrt(in_chan))
    wa = jax.random.normal(k2, (out_chan, mid), jnp.float32) * (1.0 / jnp.sqrt(out_chan))
    wb = jax.random.normal(k3, (mid, out_chan), jnp.float32) * (1.0 / jnp.sqrt(mid))
    # Eval-mode BatchNorm2d folding (PyTorch default init is gamma=1, beta=0,
    # mean=0, var=1; randomized here so the fold is actually exercised).
    eps = 1e-5
    gamma = 1.0 + 0.2 * jax.random.normal(k4, (out_chan,), jnp.float32)
    beta = 0.1 * jax.random.normal(k5, (out_chan,), jnp.float32)
    run_mean = 0.1 * jax.random.normal(k6, (out_chan,), jnp.float32)
    run_var = 1.0 + 0.2 * jax.random.uniform(k7, (out_chan,), jnp.float32)
    inv_std = 1.0 / jnp.sqrt(run_var + eps)
    bn_scale = gamma * inv_std
    bn_bias = beta - run_mean * gamma * inv_std
    return w1, bn_scale, bn_bias, wa, wb


def mhil_reference(fcat_nchw, w1, bn_scale, bn_bias, wa, wb):
    """Plain-JAX reference mirroring the PyTorch forward (eval-mode BN)."""
    B, C, H, W = fcat_nchw.shape
    x = jnp.transpose(fcat_nchw, (0, 2, 3, 1)).reshape(B, H * W, C).astype(jnp.float32)
    feat = jnp.einsum("bsc,co->bso", x, w1) * bn_scale + bn_bias
    pooled = jnp.mean(feat, axis=1, keepdims=True)                  # (B, 1, C_out)
    h = jnp.maximum(jnp.einsum("bsc,cm->bsm", pooled, wa), 0.0)
    att = jax.nn.sigmoid(jnp.einsum("bsm,mc->bsc", h, wb))          # (B, 1, C_out)
    out = x * att + x
    return jnp.transpose(out.reshape(B, H, W, C), (0, 3, 1, 2))


if __name__ == "__main__":
    key = jax.random.PRNGKey(0)
    B, C, H, W = 2, 8, 16, 16          # in_chan == out_chan == 8, out_chan // 4 == 2
    k_x, k_p = jax.random.split(key)
    fcat = jax.random.normal(k_x, (B, C, H, W), jnp.float32)
    params = init_params(k_p, C, C)

    ref = mhil_reference(fcat, *params)

    # Default path: fused single pass (x read once, written once).
    out = jax.block_until_ready(mhil_block(fcat, *params))
    assert out.shape == (B, C, H, W) and out.dtype == fcat.dtype
    assert jnp.allclose(out, ref, atol=1e-5, rtol=1e-5), "fused path mismatch vs reference"

    # Tiled two-pass fallback (exercises cross-tile mean accumulation).
    out2 = jax.block_until_ready(
        mhil_block(fcat, *params, force_two_pass=True, spatial_tile=128))
    assert jnp.allclose(out2, ref, atol=1e-5, rtol=1e-5), "two-pass path mismatch vs reference"

    # Native bf16 I/O (no wrapper upcast; output dtype follows the input).
    fcat_bf = fcat.astype(jnp.bfloat16)
    ref_bf = mhil_reference(fcat_bf.astype(jnp.float32), *params)
    out_bf = jax.block_until_ready(mhil_block(fcat_bf, *params))
    assert out_bf.dtype == jnp.bfloat16
    assert jnp.allclose(out_bf.astype(jnp.float32), ref_bf, atol=5e-2, rtol=5e-2), \
        "bf16 path mismatch vs reference"

    print("KERNEL_OK")
</pallas_src>

<mosaic_0001>
module attributes {stable_mosaic.version = 11 : i64} {
  func.func @_fused_kernel(%arg0: i32, %arg1: memref<1x8x256xf32, #tpu.memory_space<vmem>>, %arg2: memref<8x8xf32, #tpu.memory_space<vmem>>, %arg3: memref<1x8xf32, #tpu.memory_space<vmem>>, %arg4: memref<1x8xf32, #tpu.memory_space<vmem>>, %arg5: memref<2x8xf32, #tpu.memory_space<vmem>>, %arg6: memref<2x8xf32, #tpu.memory_space<vmem>>, %arg7: memref<1x8x256xf32, #tpu.memory_space<vmem>>) attributes {dimension_semantics = [#tpu.dimension_semantics<parallel>], iteration_bounds = array<i64: 2>, scalar_prefetch = 0 : i64, scratch_operands = 0 : i64, tpu.core_type = #tpu.core_type<tc>, window_params = [{transform_indices = @transform_0, window_bounds = array<i64: 1, 8, 256>}, {pipeline_mode = #tpu.pipeline_mode<synchronous>, transform_indices = @transform_1, window_bounds = array<i64: 8, 8>}, {pipeline_mode = #tpu.pipeline_mode<synchronous>, transform_indices = @transform_2, window_bounds = array<i64: 1, 8>}, {pipeline_mode = #tpu.pipeline_mode<synchronous>, transform_indices = @transform_3, window_bounds = array<i64: 1, 8>}, {pipeline_mode = #tpu.pipeline_mode<synchronous>, transform_indices = @transform_4, window_bounds = array<i64: 2, 8>}, {pipeline_mode = #tpu.pipeline_mode<synchronous>, transform_indices = @transform_5, window_bounds = array<i64: 2, 8>}, {transform_indices = @transform_6, window_bounds = array<i64: 1, 8, 256>}]} {
    %c0 = arith.constant 0 : index
    %c0_0 = arith.constant 0 : index
    %c0_1 = arith.constant 0 : index
    %0 = vector.load %arg1[%c0, %c0_0, %c0_1] : memref<1x8x256xf32, #tpu.memory_space<vmem>>, vector<1x8x256xf32>
    %1 = vector.shape_cast %0 : vector<1x8x256xf32> to vector<8x256xf32>
    %cst = arith.constant dense<0.000000e+00> : vector<8xf32>
    %2 = vector.multi_reduction <add>, %1, %cst [1] : vector<8x256xf32> to vector<8xf32>
    %3 = vector.shape_cast %2 : vector<8xf32> to vector<8x1xf32>
    %cst_2 = arith.constant 3.906250e-03 : f32
    %4 = vector.broadcast %cst_2 : f32 to vector<8x1xf32>
    %5 = arith.mulf %3, %4 : vector<8x1xf32>
    %c0_3 = arith.constant 0 : index
    %c0_4 = arith.constant 0 : index
    %6 = vector.load %arg2[%c0_3, %c0_4] : memref<8x8xf32, #tpu.memory_space<vmem>>, vector<8x8xf32>
    %7 = vector.broadcast %5 : vector<8x1xf32> to vector<8x8xf32>
    %8 = arith.mulf %6, %7 : vector<8x8xf32>
    %cst_5 = arith.constant dense<0.000000e+00> : vector<8xf32>
    %9 = vector.multi_reduction <add>, %8, %cst_5 [0] : vector<8x8xf32> to vector<8xf32>
    %10 = vector.shape_cast %9 : vector<8xf32> to vector<1x8xf32>
    %c0_6 = arith.constant 0 : index
    %c0_7 = arith.constant 0 : index
    %11 = vector.load %arg3[%c0_6, %c0_7] : memref<1x8xf32, #tpu.memory_space<vmem>>, vector<1x8xf32>
    %12 = arith.mulf %10, %11 : vector<1x8xf32>
    %c0_8 = arith.constant 0 : index
    %c0_9 = arith.constant 0 : index
    %13 = vector.load %arg4[%c0_8, %c0_9] : memref<1x8xf32, #tpu.memory_space<vmem>>, vector<1x8xf32>
    %14 = arith.addf %12, %13 : vector<1x8xf32>
    %c0_10 = arith.constant 0 : index
    %c0_11 = arith.constant 0 : index
    %15 = vector.load %arg5[%c0_10, %c0_11] : memref<2x8xf32, #tpu.memory_space<vmem>>, vector<2x8xf32>
    %16 = vector.broadcast %14 : vector<1x8xf32> to vector<2x8xf32>
    %17 = arith.mulf %15, %16 : vector<2x8xf32>
    %cst_12 = arith.constant dense<0.000000e+00> : vector<2xf32>
    %18 = vector.multi_reduction <add>, %17, %cst_12 [1] : vector<2x8xf32> to vector<2xf32>
    %19 = vector.shape_cast %18 : vector<2xf32> to vector<2x1xf32>
    %cst_13 = arith.constant 0.000000e+00 : f32
    %20 = vector.broadcast %cst_13 : f32 to vector<2x1xf32>
    %21 = arith.maximumf %19, %20 : vector<2x1xf32>
    %c0_14 = arith.constant 0 : index
    %c0_15 = arith.constant 0 : index
    %22 = vector.load %arg6[%c0_14, %c0_15] : memref<2x8xf32, #tpu.memory_space<vmem>>, vector<2x8xf32>
    %23 = vector.broadcast %21 : vector<2x1xf32> to vector<2x8xf32>
    %24 = arith.mulf %22, %23 : vector<2x8xf32>
    %cst_16 = arith.constant dense<0.000000e+00> : vector<8xf32>
    %25 = vector.multi_reduction <add>, %24, %cst_16 [0] : vector<2x8xf32> to vector<8xf32>
    %26 = vector.shape_cast %25 : vector<8xf32> to vector<1x8xf32>
    %27 = arith.negf %26 : vector<1x8xf32>
    %28 = math.exp %27 : vector<1x8xf32>
    %cst_17 = arith.constant 1.000000e+00 : f32
    %29 = vector.broadcast %cst_17 : f32 to vector<1x8xf32>
    %30 = arith.addf %29, %28 : vector<1x8xf32>
    %31 = arith.divf %29, %30 : vector<1x8xf32>
    %cst_18 = arith.constant 1.000000e+00 : f32
    %32 = vector.broadcast %cst_18 : f32 to vector<1x8xf32>
    %33 = arith.addf %31, %32 : vector<1x8xf32>
    %34 = tpu.iota {dimensions = array<i32: 0>} : vector<8x8xi32>
    %35 = tpu.iota {dimensions = array<i32: 1>} : vector<8x8xi32>
    %36 = arith.cmpi eq, %34, %35 : vector<8x8xi32>
    %37 = vector.shape_cast %33 : vector<1x8xf32> to vector<1x8xf32>
    %38 = vector.broadcast %37 : vector<1x8xf32> to vector<8x8xf32>
    %cst_19 = arith.constant 0.000000e+00 : f32
    %39 = vector.broadcast %cst_19 : f32 to vector<8x8xf32>
    %40 = arith.select %36, %38, %39 : vector<8x8xi1>, vector<8x8xf32>
    %cst_20 = arith.constant dense<0.000000e+00> : vector<8xf32>
    %41 = vector.multi_reduction <add>, %40, %cst_20 [1] : vector<8x8xf32> to vector<8xf32>
    %42 = vector.shape_cast %41 : vector<8xf32> to vector<8x1xf32>
    %43 = vector.broadcast %42 : vector<8x1xf32> to vector<8x256xf32>
    %44 = arith.mulf %1, %43 : vector<8x256xf32>
    %c0_21 = arith.constant 0 : index
    %c0_22 = arith.constant 0 : index
    %c0_23 = arith.constant 0 : index
    %45 = vector.load %arg7[%c0_21, %c0_22, %c0_23] : memref<1x8x256xf32, #tpu.memory_space<vmem>>, vector<1x8x256xf32>
    %46 = vector.shape_cast %45 : vector<1x8x256xf32> to vector<8x256xf32>
    %47 = vector.shape_cast %44 : vector<8x256xf32> to vector<1x8x256xf32>
    tpu.vector_store %arg7[%c0_21, %c0_22, %c0_23], %47 {strides = array<i32>} : memref<1x8x256xf32, #tpu.memory_space<vmem>>, vector<1x8x256xf32>,
    return
  }
  func.func @transform_0(%arg0: i32) -> (i32, i32, i32) {
    %c0_i32 = arith.constant 0 : i32
    %c0_i32_0 = arith.constant 0 : i32
    %c0_i32_1 = arith.constant 0 : i32
    return %arg0, %c0_i32, %c0_i32_0 : i32, i32, i32
  }
  func.func @transform_1(%arg0: i32) -> (i32, i32) {
    %c0_i32 = arith.constant 0 : i32
    %c0_i32_0 = arith.constant 0 : i32
    %c0_i32_1 = arith.constant 0 : i32
    return %c0_i32, %c0_i32_0 : i32, i32
  }
  func.func @transform_2(%arg0: i32) -> (i32, i32) {
    %c0_i32 = arith.constant 0 : i32
    %c0_i32_0 = arith.constant 0 : i32
    %c0_i32_1 = arith.constant 0 : i32
    return %c0_i32, %c0_i32_0 : i32, i32
  }
  func.func @transform_3(%arg0: i32) -> (i32, i32) {
    %c0_i32 = arith.constant 0 : i32
    %c0_i32_0 = arith.constant 0 : i32
    %c0_i32_1 = arith.constant 0 : i32
    return %c0_i32, %c0_i32_0 : i32, i32
  }
  func.func @transform_4(%arg0: i32) -> (i32, i32) {
    %c0_i32 = arith.constant 0 : i32
    %c0_i32_0 = arith.constant 0 : i32
    %c0_i32_1 = arith.constant 0 : i32
    return %c0_i32, %c0_i32_0 : i32, i32
  }
  func.func @transform_5(%arg0: i32) -> (i32, i32) {
    %c0_i32 = arith.constant 0 : i32
    %c0_i32_0 = arith.constant 0 : i32
    %c0_i32_1 = arith.constant 0 : i32
    return %c0_i32, %c0_i32_0 : i32, i32
  }
  func.func @transform_6(%arg0: i32) -> (i32, i32, i32) {
    %c0_i32 = arith.constant 0 : i32
    %c0_i32_0 = arith.constant 0 : i32
    %c0_i32_1 = arith.constant 0 : i32
    return %arg0, %c0_i32, %c0_i32_0 : i32, i32, i32
  }
}

</mosaic_0001>

<llo_original>
// kernel: tpu_custom_call.1
$region0: #{tpu_custom_call.1}
  #allocation0 [shape = 'u32[]', space=smem, size = 0x4, offset = 0x4, fixed_abs, tag = 'smem constant byte address 0x4 - core index']
  #allocation1 [shape = 'u32[144,128]{1,0:T(1,128)}', space=vmem, size = 0x12000, scoped, tag = 'internal scratch']
  %s0 = inlined_call_operand.hbm [shape: f32[2,8,256], index: 0, kind: input, shape index: {}]
  %s1 = inlined_call_operand.hbm [shape: f32[8,8], index: 1, kind: input, shape index: {}]
  %s2 = inlined_call_operand.vmem [shape: f32[1,8], index: 2, kind: input, shape index: {}]
  %s3 = inlined_call_operand.vmem [shape: f32[1,8], index: 3, kind: input, shape index: {}]
  %s4 = inlined_call_operand.vmem [shape: f32[2,8], index: 4, kind: input, shape index: {}]
  %s5 = inlined_call_operand.vmem [shape: f32[2,8], index: 5, kind: input, shape index: {}]
  %s6 = inlined_call_operand.hbm [shape: f32[2,8,256], index: 6, kind: output, shape index: {}]
  %s7 = sld [smem:[#allocation0]]
  $region65: #{tpu_custom_call.1} parent=0
    _
  %s9 = ssub.s32 1, %s7
  %s10 = scalar_select 0, %s9, %s7
  $region1: #{tpu_custom_call.1} parent=0
    #allocation2 [shape = 'u8[16384]{0}', space=vmem, size = 0x4000, scoped, tag = 'input window, operand 0']
    #allocation3 [shape = 's32[2]{0}', space=sflag, size = 0x8, scoped, tag = 'scoped memory for tpu_custom_call.1']
    #allocation4 [shape = 's32[2]{0}', space=sflag, size = 0x8, scoped, tag = 'scoped memory for tpu_custom_call.1']
    #allocation5 [shape = 'u8[4096]{0}', space=vmem, size = 0x1000, scoped, tag = 'input window, operand 1, single buffered']
    #allocation6 [shape = 's32[1]{0}', space=sflag, size = 0x4, scoped, tag = 'scoped memory for tpu_custom_call.1']
    #allocation7 [shape = 'u8[16384]{0}', space=vmem, size = 0x4000, scoped, tag = 'output window, operand 0']
    %11 = vsyncpa [#allocation3], 0
    %s12 = scalar_lea.sflag [#allocation3], 1
    %13 = vsyncpa %s12, 0
    %14 = vsyncpa [#allocation6], 0
    %15 = vsyncpa [#allocation4], 0
    %s16 = scalar_lea.sflag [#allocation4], 1
    %17 = vsyncpa %s16, 0
    loop: start=0, step=1, limit=4
    $region2: #{tpu_custom_call.1} parent=1 // loop_pre_header
      _
    $region3: #{tpu_custom_call.1} parent=1 // loop_header
      %s19 = sphi 0, %s23
      %p20 = scmp.ge.s32.totalorder %s19, 4
      %s29 = sphi 0, %s31
      %s32 = sphi 0, %s29
      %s33 = sphi 0, %s32
      %s49 = sphi 0, %s33
      %s53 = sphi 0, %s53
      %s55 = sphi 0, %s53
      %s56 = sphi 0, %s55
      %s70 = sphi 0, %s56
      %s74 = sphi 0, %s74
      %s76 = sphi 0, %s74
      %s77 = sphi 0, %s76
      %s91 = sphi 0, %s77
      %s95 = sphi 0, %s95
      %s97 = sphi 0, %s95
      %s98 = sphi 0, %s97
      %s112 = sphi 0, %s98
      %s116 = sphi 0, %s116
      %s118 = sphi 0, %s116
      %s119 = sphi 0, %s118
      %s133 = sphi 0, %s119
      %s137 = sphi 0, %s137
      %s139 = sphi 0, %s137
      %s140 = sphi 0, %s139
      %s154 = sphi 0, %s140
      %s160 = sphi 0, %s162
      %s163 = sphi 0, %s160
      %s164 = sphi 0, %s163
      %s180 = sphi 0, %s164
    $region4: #{tpu_custom_call.1} parent=1 // loop_header_branch
      %22 = sbr.rel (%p20) target = $region8
    $region5: #{tpu_custom_call.1} parent=1 // loop_body
      %s24 = ssub.s32 %s19, 1
      %s25 = ssub.s32 %s19, 2
      %s26 = sadd.s32 %s19, 1
      %s27 = ssub.s32 %s19, %s26
      %p28 = scmp.eq.s32.totalorder %s27, 0
      %s30 = sadd.s32 %s29, 1
      %s31 = scalar_select %p28, %s29, %s30
      %p34 = pneg %p28
      %p35 = scmp.eq.s32.totalorder %s19, 1
      %p36 = por %p34, %p35
      %p37 = scmp.ne.s32.totalorder %s29, %s32
      %p38 = scmp.eq.s32.totalorder %s19, 0
      %p39 = por %p37, %p38
      %p40 = scmp.ne.s32.totalorder %s29, %s32
      %p41 = scmp.eq.s32.totalorder %s24, 1
      %p42 = por %p40, %p41
      %p43 = scmp.ne.s32.totalorder %s32, %s33
      %p44 = scmp.eq.s32.totalorder %s24, 0
      %p45 = por %p43, %p44
      %p46 = scmp.ne.s32.totalorder %s32, %s33
      %p47 = scmp.eq.s32.totalorder %s25, 1
      %p48 = por %p46, %p47
      %p50 = scmp.ne.s32.totalorder %s33, %s49
      %p51 = scmp.eq.s32.totalorder %s25, 0
      %p52 = por %p50, %p51
      %s54 = sadd.s32 %s53, 1
      %p57 = scmp.eq.s32.totalorder %s19, 1
      %p58 = scmp.ne.s32.totalorder %s53, %s55
      %p59 = scmp.eq.s32.totalorder %s19, 0
      %p60 = por %p58, %p59
      %p61 = scmp.ne.s32.totalorder %s53, %s55
      %p62 = scmp.eq.s32.totalorder %s24, 1
      %p63 = por %p61, %p62
      %p64 = scmp.ne.s32.totalorder %s55, %s56
      %p65 = scmp.eq.s32.totalorder %s24, 0
      %p66 = por %p64, %p65
      %p67 = scmp.ne.s32.totalorder %s55, %s56
      %p68 = scmp.eq.s32.totalorder %s25, 1
      %p69 = por %p67, %p68
      %p71 = scmp.ne.s32.totalorder %s56, %s70
      %p72 = scmp.eq.s32.totalorder %s25, 0
      %p73 = por %p71, %p72
      %s75 = sadd.s32 %s74, 1
      %p78 = scmp.eq.s32.totalorder %s19, 1
      %p79 = scmp.ne.s32.totalorder %s74, %s76
      %p80 = scmp.eq.s32.totalorder %s19, 0
      %p81 = por %p79, %p80
      %p82 = scmp.ne.s32.totalorder %s74, %s76
      %p83 = scmp.eq.s32.totalorder %s24, 1
      %p84 = por %p82, %p83
      %p85 = scmp.ne.s32.totalorder %s76, %s77
      %p86 = scmp.eq.s32.totalorder %s24, 0
      %p87 = por %p85, %p86
      %p88 = scmp.ne.s32.totalorder %s76, %s77
      %p89 = scmp.eq.s32.totalorder %s25, 1
      %p90 = por %p88, %p89
      %p92 = scmp.ne.s32.totalorder %s77, %s91
      %p93 = scmp.eq.s32.totalorder %s25, 0
      %p94 = por %p92, %p93
      %s96 = sadd.s32 %s95, 1
      %p99 = scmp.eq.s32.totalorder %s19, 1
      %p100 = scmp.ne.s32.totalorder %s95, %s97
      %p101 = scmp.eq.s32.totalorder %s19, 0
      %p102 = por %p100, %p101
      %p103 = scmp.ne.s32.totalorder %s95, %s97
      %p104 = scmp.eq.s32.totalorder %s24, 1
      %p105 = por %p103, %p104
      %p106 = scmp.ne.s32.totalorder %s97, %s98
      %p107 = scmp.eq.s32.totalorder %s24, 0
      %p108 = por %p106, %p107
      %p109 = scmp.ne.s32.totalorder %s97, %s98
      %p110 = scmp.eq.s32.totalorder %s25, 1
      %p111 = por %p109, %p110
      %p113 = scmp.ne.s32.totalorder %s98, %s112
      %p114 = scmp.eq.s32.totalorder %s25, 0
      %p115 = por %p113, %p114
      %s117 = sadd.s32 %s116, 1
      %p120 = scmp.eq.s32.totalorder %s19, 1
      %p121 = scmp.ne.s32.totalorder %s116, %s118
      %p122 = scmp.eq.s32.totalorder %s19, 0
      %p123 = por %p121, %p122
      %p124 = scmp.ne.s32.totalorder %s116, %s118
      %p125 = scmp.eq.s32.totalorder %s24, 1
      %p126 = por %p124, %p125
      %p127 = scmp.ne.s32.totalorder %s118, %s119
      %p128 = scmp.eq.s32.totalorder %s24, 0
      %p129 = por %p127, %p128
      %p130 = scmp.ne.s32.totalorder %s118, %s119
      %p131 = scmp.eq.s32.totalorder %s25, 1
      %p132 = por %p130, %p131
      %p134 = scmp.ne.s32.totalorder %s119, %s133
      %p135 = scmp.eq.s32.totalorder %s25, 0
      %p136 = por %p134, %p135
      %s138 = sadd.s32 %s137, 1
      %p141 = scmp.eq.s32.totalorder %s19, 1
      %p142 = scmp.ne.s32.totalorder %s137, %s139
      %p143 = scmp.eq.s32.totalorder %s19, 0
      %p144 = por %p142, %p143
      %p145 = scmp.ne.s32.totalorder %s137, %s139
      %p146 = scmp.eq.s32.totalorder %s24, 1
      %p147 = por %p145, %p146
      %p148 = scmp.ne.s32.totalorder %s139, %s140
      %p149 = scmp.eq.s32.totalorder %s24, 0
      %p150 = por %p148, %p149
      %p151 = scmp.ne.s32.totalorder %s139, %s140
      %p152 = scmp.eq.s32.totalorder %s25, 1
      %p153 = por %p151, %p152
      %p155 = scmp.ne.s32.totalorder %s140, %s154
      %p156 = scmp.eq.s32.totalorder %s25, 0
      %p157 = por %p155, %p156
      %s158 = ssub.s32 %s19, %s26
      %p159 = scmp.eq.s32.totalorder %s158, 0
      %s161 = sadd.s32 %s160, 1
      %s162 = scalar_select %p159, %s160, %s161
      %p165 = pneg %p159
      %p166 = scmp.eq.s32.totalorder %s19, 1
      %p167 = por %p165, %p166
      %p168 = scmp.ne.s32.totalorder %s160, %s163
      %p169 = scmp.eq.s32.totalorder %s19, 0
      %p170 = por %p168, %p169
      %p171 = scmp.ne.s32.totalorder %s160, %s163
      %p172 = scmp.eq.s32.totalorder %s24, 1
      %p173 = por %p171, %p172
      %p174 = scmp.ne.s32.totalorder %s163, %s164
      %p175 = scmp.eq.s32.totalorder %s24, 0
      %p176 = por %p174, %p175
      %p177 = scmp.ne.s32.totalorder %s163, %s164
      %p178 = scmp.eq.s32.totalorder %s25, 1
      %p179 = por %p177, %p178
      %p181 = scmp.ne.s32.totalorder %s164, %s180
      %p182 = scmp.eq.s32.totalorder %s25, 0
      %p183 = por %p181, %p182
      %p184 = scmp.le.s32.totalorder 1, %s19
      %p185 = scmp.lt.s32.totalorder %s19, 3
      %p186 = pnand %p184, %p185
      %p187 = pneg %p186
      // Predicated region
      $region9: #{tpu_custom_call.1} parent=5 // pred_check
        _
      $region10: #{tpu_custom_call.1} parent=5 // pred_check_branch
        %189 = sbr.rel (%p186) target = $region12
      $region11: #{tpu_custom_call.1} parent=5 // pred_region
        %s190 = ssub.s32 %s19, 1
        // Predicated region
        $region13: #{tpu_custom_call.1} parent=11 // pred_check
          %p191 = pneg %p66
        $region14: #{tpu_custom_call.1} parent=11 // pred_check_branch
          %193 = sbr.rel (%p191) target = $region16
        $region15: #{tpu_custom_call.1} parent=11 // pred_region
          %s195 = ssub.s32 128, 128
          %196 = vsyncadd [#allocation6], %s195
          %s198 = sshll.u32 [#allocation5], 4
          %s199 = int_to_ptr.vmem [resolvable:$true] %s198
          %201 = dma.hbm_to_vmem [thread:$0]  %s1, 128, %s199, [#allocation6]
        $region16: #{tpu_custom_call.1} parent=11 // pred_fallthru
          _
        // Predicated region
        $region17: #{tpu_custom_call.1} parent=11 // pred_check
          %p202 = pneg %p87
        $region18: #{tpu_custom_call.1} parent=11 // pred_check_branch
          %204 = sbr.rel (%p202) target = $region20
        $region19: #{tpu_custom_call.1} parent=11 // pred_region
          _
        $region20: #{tpu_custom_call.1} parent=11 // pred_fallthru
          _
        // Predicated region
        $region21: #{tpu_custom_call.1} parent=11 // pred_check
          %p205 = pneg %p108
        $region22: #{tpu_custom_call.1} parent=11 // pred_check_branch
          %207 = sbr.rel (%p205) target = $region24
        $region23: #{tpu_custom_call.1} parent=11 // pred_region
          _
        $region24: #{tpu_custom_call.1} parent=11 // pred_fallthru
          _
        // Predicated region
        $region25: #{tpu_custom_call.1} parent=11 // pred_check
          %p208 = pneg %p129
        $region26: #{tpu_custom_call.1} parent=11 // pred_check_branch
          %210 = sbr.rel (%p208) target = $region28
        $region27: #{tpu_custom_call.1} parent=11 // pred_region
          _
        $region28: #{tpu_custom_call.1} parent=11 // pred_fallthru
          _
        // Predicated region
        $region29: #{tpu_custom_call.1} parent=11 // pred_check
          %p211 = pneg %p150
        $region30: #{tpu_custom_call.1} parent=11 // pred_check_branch
          %213 = sbr.rel (%p211) target = $region32
        $region31: #{tpu_custom_call.1} parent=11 // pred_region
          _
        $region32: #{tpu_custom_call.1} parent=11 // pred_fallthru
          _
      $region12: #{tpu_custom_call.1} parent=5 // pred_fallthru
        _
      %p214 = scmp.lt.s32.totalorder %s19, 2
      // Predicated region
      $region33: #{tpu_custom_call.1} parent=5 // pred_check
        %p215 = pneg %p214
      $region34: #{tpu_custom_call.1} parent=5 // pred_check_branch
        %217 = sbr.rel (%p215) target = $region36
      $region35: #{tpu_custom_call.1} parent=5 // pred_region
        // Predicated region
        $region37: #{tpu_custom_call.1} parent=35 // pred_check
          %p218 = pneg %p39
        $region38: #{tpu_custom_call.1} parent=35 // pred_check_branch
          %220 = sbr.rel (%p218) target = $region40
        $region39: #{tpu_custom_call.1} parent=35 // pred_region
          %s221 = sand.u32 %s29, 1
          %s222 = scalar_lea.sflag [#allocation3], %s221
          %s223 = sand.u32 %s29, 1
          %s224 = smul.addr %s223, 16
          %s225 = scalar_lea.vmem [#allocation2], %s224
          %s227 = ssub.s32 256, 256
          %228 = vsyncadd %s222, %s227
          %s229 = smul.addr %s19, 2
          %s230 = smul.addr %s229, 128
          %s231 = scalar_lea.hbm %s0, %s230
          %s233 = sshll.u32 %s225, 4
          %s234 = int_to_ptr.vmem [resolvable:$true] %s233
          %236 = dma.hbm_to_vmem [thread:$0]  %s231, 256, %s234, %s222
        $region40: #{tpu_custom_call.1} parent=35 // pred_fallthru
          _
      $region36: #{tpu_custom_call.1} parent=5 // pred_fallthru
        _
      %p237 = scmp.le.s32.totalorder 1, %s19
      %p238 = scmp.lt.s32.totalorder %s19, 3
      %p239 = pnand %p237, %p238
      %p240 = pneg %p239
      // Predicated region
      $region41: #{tpu_custom_call.1} parent=5 // pred_check
        _
      $region42: #{tpu_custom_call.1} parent=5 // pred_check_branch
        %242 = sbr.rel (%p239) target = $region44
      $region43: #{tpu_custom_call.1} parent=5 // pred_region
        %s243 = ssub.s32 %s19, 1
        %s244 = sand.u32 %s32, 1
        %s245 = scalar_lea.sflag [#allocation3], %s244
        %s246 = sand.u32 %s32, 1
        %s247 = smul.addr %s246, 16
        %s248 = scalar_lea.vmem [#allocation2], %s247
        // Predicated region
        $region45: #{tpu_custom_call.1} parent=43 // pred_check
          %p249 = pneg %p45
        $region46: #{tpu_custom_call.1} parent=43 // pred_check_branch
          %251 = sbr.rel (%p249) target = $region48
        $region47: #{tpu_custom_call.1} parent=43 // pred_region
          %252 = dma.done %s245, 256
        $region48: #{tpu_custom_call.1} parent=43 // pred_fallthru
          _
        // Predicated region
        $region49: #{tpu_custom_call.1} parent=43 // pred_check
          %p253 = pneg %p66
        $region50: #{tpu_custom_call.1} parent=43 // pred_check_branch
          %255 = sbr.rel (%p253) target = $region52
        $region51: #{tpu_custom_call.1} parent=43 // pred_region
          %256 = dma.done [#allocation6], 128
        $region52: #{tpu_custom_call.1} parent=43 // pred_fallthru
          _
        %s257 = sand.u32 %s32, 1
        %s258 = scalar_lea.sflag [#allocation3], %s257
        %s259 = sand.u32 %s32, 1
        %s260 = smul.addr %s259, 16
        %s261 = scalar_lea.vmem [#allocation2], %s260
        %p262 = pneg %p45
        %p263 = pneg %p42
        %p264 = pneg %p66
        %p265 = pneg %p63
        %p266 = pneg %p87
        %p267 = pneg %p84
        %p268 = pneg %p108
        %p269 = pneg %p105
        %p270 = pneg %p129
        %p271 = pneg %p126
        %p272 = pneg %p150
        %p273 = pneg %p147
        %p274 = pneg %p176
        %p275 = pneg %p173
        %s276 = sand.u32 %s163, 1
        %s277 = scalar_lea.sflag [#allocation4], %s276
        %s278 = sand.u32 %s163, 1
        %s279 = smul.addr %s278, 16
        %s280 = scalar_lea.vmem [#allocation7], %s279
        %v281 = vld [vmem:[%s248] sm:$0xff]
        %v282 = vld [vmem:[%s248 + $0x8] sm:$0xff]
        %v283 = vadd.f32 %v281, %v282
        %284 = vadd.xlane.f32.xlu0 %v283
        %v285 = vpop.xlane.xlu0 %284
        %v286 = vmul.f32 %v285, 0.00390625
        %v287 = vld [vmem:[#allocation5] sm:$0xff]
        %v288 = vmul.f32 %v287, %v286
        %vm289 = vcmask 64512
        %v290 = vsel %vm289, %v288, 0.0
        %v291 = vrot.slane %v290, 4
        %v292 = vadd.f32 %v290, %v291
        %v293 = vrot.slane %v292, 2
        %v294 = vadd.f32 %v292, %v293
        %v295 = vrot.slane %v294, 1
        %v296 = vadd.f32 %v294, %v295
        %v297 = vld [vmem:[%s2] sm:$0x1]
        %v298 = vmul.f32 %v296, %v297
        %v299 = vld [vmem:[%s3] sm:$0x1]
        %v300 = vadd.f32 %v298, %v299
        %v301 = vld [vmem:[%s4] sm:$0x3]
        %v302 = vlaneseq
        %v303 = vshrl.u32 %v302, 7
        %v304 = vsub.s32 0, %v303
        %v305 = vrot.slane %v300, %v304
        %v306 = vmul.f32 %v301, %v305
        %vm307 = vcmask 58368
        %v308 = vsel %vm307, %v306, 0.0
        %309 = vadd.xlane.f32.xlu0 %v308
        %v310 = vpop.xlane.xlu0 %309
        %v311 = vmax.f32 %v310, 0.0
        %v312 = vld [vmem:[%s5] sm:$0x3]
        %v313 = vmul.f32 %v312, %v311
        %v314 = vsel %vm307, %v313, 0.0
        %v315 = vrot.slane %v314, 4
        %v316 = vadd.f32 %v314, %v315
        %v317 = vrot.slane %v316, 2
        %v318 = vadd.f32 %v316, %v317
        %v319 = vrot.slane %v318, 1
        %v320 = vadd.f32 %v318, %v319
        %v321 = vxor.u32 %v320, 2147483648
        %v322 = vmul.f32 %v321, 1.442695
        %v323 = vpow.pop %v322
        %v324 = vadd.f32 %v323, 1.0
        %v325 = vrcp.pop %v324
        %v326 = vmul.f32 1.0, %v325
        %v327 = vadd.f32 %v326, 1.0
        %v328 = vlaneseq
        %v329 = vshrl.u32 %v328, 7
        %v330 = vlaneseq
        %v331 = vand.u32 %v330, 127
        %vm332 = vcmp.eq.s32.totalorder %v329, %v331
        %v333 = vsel %vm332, %v327, 0.0
        %v334 = vsel %vm289, %v333, 0.0
        %335 = vadd.xlane.f32.xlu0 %v334
        %v336 = vpop.xlane.xlu0 %335
        %v337 = vmul.f32 %v281, %v336
        %v338 = vmul.f32 %v282, %v336
        %339 = vst [vmem:[%s280] sm:$0xff] %v337
        %340 = vst [vmem:[%s280 + $0x8] sm:$0xff] %v338
        %s341 = sand.u32 %s163, 1
        %s342 = scalar_lea.sflag [#allocation4], %s341
        %s343 = sand.u32 %s163, 1
        %s344 = smul.addr %s343, 16
        %s345 = scalar_lea.vmem [#allocation7], %s344
        // Predicated region
        $region53: #{tpu_custom_call.1} parent=43 // pred_check
          %p346 = pneg %p173
        $region54: #{tpu_custom_call.1} parent=43 // pred_check_branch
          %348 = sbr.rel (%p346) target = $region56
        $region55: #{tpu_custom_call.1} parent=43 // pred_region
          %s350 = ssub.s32 256, 256
          %351 = vsyncadd %s342, %s350
          %s352 = smul.addr %s24, 2
          %s353 = smul.addr %s352, 128
          %s354 = scalar_lea.hbm %s6, %s353
          %s356 = sshll.u32 %s345, 4
          %s357 = int_to_ptr.vmem [resolvable:$true] %s356
          %359 = dma.vmem_to_hbm [thread:$0]  %s357, 256, %s354, %s342
        $region56: #{tpu_custom_call.1} parent=43 // pred_fallthru
          _
      $region44: #{tpu_custom_call.1} parent=5 // pred_fallthru
        _
      %p360 = scmp.le.s32.totalorder 2, %s19
      // Predicated region
      $region57: #{tpu_custom_call.1} parent=5 // pred_check
        %p361 = pneg %p360
      $region58: #{tpu_custom_call.1} parent=5 // pred_check_branch
        %363 = sbr.rel (%p361) target = $region60
      $region59: #{tpu_custom_call.1} parent=5 // pred_region
        %s364 = ssub.s32 %s19, 2
        // Predicated region
        $region61: #{tpu_custom_call.1} parent=59 // pred_check
          %p365 = pneg %p179
        $region62: #{tpu_custom_call.1} parent=59 // pred_check_branch
          %367 = sbr.rel (%p365) target = $region64
        $region63: #{tpu_custom_call.1} parent=59 // pred_region
          %s368 = sand.u32 %s164, 1
          %s369 = scalar_lea.sflag [#allocation4], %s368
          %s370 = sand.u32 %s164, 1
          %s371 = smul.addr %s370, 16
          %s372 = scalar_lea.vmem [#allocation7], %s371
          %373 = dma.done %s369, 256
        $region64: #{tpu_custom_call.1} parent=59 // pred_fallthru
          _
      $region60: #{tpu_custom_call.1} parent=5 // pred_fallthru
        _
    $region6: #{tpu_custom_call.1} parent=1 // loop_footer
      %s23 = sadd.s32 1, %s19
    $region7: #{tpu_custom_call.1} parent=1 // loop_footer_branch
      %18 = sbr.rel target = $region3
    $region8: #{tpu_custom_call.1} parent=1 // loop_exit
      _
    %374 = vsyncpa [#allocation3], 1
    %s375 = scalar_lea.sflag [#allocation3], 1
    %376 = vsyncpa %s375, 1
    %377 = vsyncpa [#allocation6], 1
    %378 = vsyncpa [#allocation4], 1
    %s379 = scalar_lea.sflag [#allocation4], 1
    %380 = vsyncpa %s379, 1

</llo_original>
